<compile_context>
chip_gen: v7x
topology: tpu7x:2x2x1
jax: 0.10.0
libtpu: 0.0.40
codegen_flags: <defaults>
</compile_context>

<pallas_src>
import functools

import jax
import jax.numpy as jnp
from jax.experimental import pallas as pl
from jax.experimental.pallas import tpu as pltpu


# ----------------------------- in-kernel math -------------------------------

def _focal_pow(x, gamma):
    """(1 - pt) ** gamma specialized for common gammas."""
    if gamma == 2.0:
        return x * x
    if float(int(gamma)) == float(gamma) and int(gamma) >= 0:
        return jax.lax.integer_pow(x, int(gamma))
    # Non-integer gamma: guard x == 0 so exp(gamma*log(0)) stays finite.
    return jnp.where(x > 0.0, x ** jnp.float32(gamma), 0.0)


def _per_sample_focal(logits_ref, targets_ref, gamma, alpha, class_axis):
    """Per-sample focal loss on one block.

    class_axis == 0: lane-major layout, logits (C, T), targets (1, T) -> (1, T) f32.
    class_axis == 1: row-major  layout, logits (T, C), targets (T, 1) -> (T, 1) f32.
    """
    logits = logits_ref[...].astype(jnp.float32)    # widen in-kernel (VPU)
    tgt = targets_ref[...]                          # int32, broadcasts against iota

    mx = jnp.max(logits, axis=class_axis, keepdims=True)
    shifted = logits - mx
    lse = jnp.log(jnp.sum(jnp.exp(shifted), axis=class_axis, keepdims=True))

    # One-hot select of the target-class shifted logit (no dynamic gather), then a
    # single lse subtract -- no full log-probs temporary.
    cls_ids = jax.lax.broadcasted_iota(jnp.int32, logits.shape, class_axis)
    shifted_t = jnp.sum(jnp.where(cls_ids == tgt, shifted, 0.0),
                        axis=class_axis, keepdims=True)

    logp_t = shifted_t - lse
    ce = -logp_t
    pt = jnp.exp(logp_t)
    focal = _focal_pow(1.0 - pt, gamma) * ce
    if alpha is not None:
        # The PyTorch module only applies a scalar alpha multiplier.
        focal = jnp.float32(alpha) * focal
    return focal


# -------------------------------- kernels -----------------------------------

def _reduce_kernel(logits_ref, targets_ref, out_ref, acc_ref, *,
                   gamma, alpha, n_rows, tile, class_axis):
    """Grid = (num_splits, tiles_per_split). Each split accumulates into a VMEM
    vector accumulator and writes its partial sum to out_ref row `split` at the end."""
    ci = pl.program_id(0)   # core split (parallel axis)
    ti = pl.program_id(1)   # tile within split (arbitrary axis)

    @pl.when(ti == 0)
    def _():
        acc_ref[...] = jnp.zeros_like(acc_ref)

    focal = _per_sample_focal(logits_ref, targets_ref, gamma, alpha, class_axis)

    # Global sample index of each element in this block; masks both the padded part
    # of the last real tile and whole phantom tiles from an uneven 2-way split.
    sample_axis = 1 - class_axis
    base = (ci * pl.num_programs(1) + ti) * tile
    ids = jax.lax.broadcasted_iota(jnp.int32, focal.shape, sample_axis) + base
    # NOTE: select (not multiply) so NaN/Inf computed from garbage padded rows never
    # propagates into the accumulator.
    acc_ref[...] += jnp.where(ids < n_rows, focal, 0.0)

    @pl.when(ti == pl.num_programs(1) - 1)
    def _():
        out_ref[0, 0] = jnp.sum(acc_ref[...])


def _none_kernel(logits_ref, targets_ref, out_ref, *, gamma, alpha, class_axis):
    out_ref[...] = _per_sample_focal(logits_ref, targets_ref, gamma, alpha, class_axis)


# ----------------------------- tiling helpers --------------------------------

def _vmem_limit_bytes():
    """Scoped-VMEM limit to request: conservative on v7x (64 MiB physical), generous
    on v5e/v6e (128 MiB physical), always leaving headroom for compiler scratch."""
    try:
        cap = int(pltpu.get_tpu_info().vmem_capacity_bytes)
    except Exception:
        cap = 64 << 20  # safe fallback (v7x-sized)
    return int(min((cap * 3) // 4, 100 << 20))


def _pick_tile_lane_major(n, c, itemsize, vmem_limit):
    """Lanes = batch samples, sublanes = classes. Budget counts the double-buffered
    native-dtype logits block plus ~6 C-sized f32 temporaries per lane plus the
    lane-dense targets/output/accumulator rows."""
    budget = vmem_limit // 2
    per_lane = 2 * c * itemsize + 24 * c + 64
    t = budget // max(1, per_lane)
    t = max(128, (t // 128) * 128)
    if n <= t:
        return n                      # single block; full dim is always legal
    return int(t)


def _pick_tile_row_major(n, c, itemsize, vmem_limit):
    """Rows on sublanes (large-C fallback). The (TILE,1) targets/focal/accumulator
    columns pad to a full 128-lane vreg (~512 B/row each), so count them."""
    budget = vmem_limit // 2
    per_row = 2 * c * itemsize + 24 * c + 3 * 512
    t = budget // max(1, per_row)
    t = max(8, (t // 8) * 8)
    # TODO(synk): for very large C even 8 rows can exceed the budget; needs a
    # class-axis grid with an online log-sum-exp.
    if n <= t:
        return n
    return int(t)


# -------------------------------- wrapper ------------------------------------

def focal_loss(logits, targets, gamma=2.0, alpha=None, reduction="mean",
               tile=None, lane_major_max_classes=128):
    """logits: (N, C), targets: (N,) int -> scalar (mean/sum) or (N,) vector (none)."""
    if reduction not in ("mean", "sum", "none"):
        raise ValueError(f"unknown reduction: {reduction}")

    n, c = logits.shape
    itemsize = jnp.dtype(logits.dtype).itemsize
    vmem_limit = _vmem_limit_bytes()
    gamma = float(gamma)
    alpha = None if alpha is None else float(alpha)

    lane_major = c <= lane_major_max_classes

    if lane_major:
        # Batch mapped to lanes: logits (C, N); targets / per-sample output lane-dense.
        logits_in = logits.T
        targets_in = targets.astype(jnp.int32).reshape(1, n)
        if tile is None:
            tile = _pick_tile_lane_major(n, c, itemsize, vmem_limit)
        logits_block = (c, tile)
        targets_block = (1, tile)
        per_sample_shape = (1, n)
        per_sample_block = (1, tile)
        acc_scratch = pltpu.VMEM((1, tile), jnp.float32)
        class_axis = 0

        def block_index(t_idx):
            return (0, t_idx)
    else:
        # Large-C fallback: classic (TILE_N, C) row-major blocks.
        logits_in = logits
        targets_in = targets.astype(jnp.int32).reshape(n, 1)
        if tile is None:
            tile = _pick_tile_row_major(n, c, itemsize, vmem_limit)
        logits_block = (tile, c)
        targets_block = (tile, 1)
        per_sample_shape = (n, 1)
        per_sample_block = (tile, 1)
        acc_scratch = pltpu.VMEM((tile, 1), jnp.float32)
        class_axis = 1

        def block_index(t_idx):
            return (t_idx, 0)

    tiles_total = int(pl.cdiv(n, tile))

    if reduction in ("mean", "sum"):
        # Two-way split so v7x's two TensorCores each stream half the batch
        # (no-op cost on 1-TC v5e/v6e: the two halves just run back-to-back).
        num_splits = 2 if tiles_total >= 2 else 1
        tps = int(pl.cdiv(tiles_total, num_splits))

        def in_map(ci, ti):
            # Clamp phantom tiles (uneven split) back in range; their contribution is
            # masked to zero in-kernel via the global sample index.
            return block_index(jnp.minimum(ci * tps + ti, tiles_total - 1))

        kernel = functools.partial(_reduce_kernel, gamma=gamma, alpha=alpha,
                                   n_rows=n, tile=tile, class_axis=class_axis)
        partials = pl.pallas_call(
            kernel,
            out_shape=jax.ShapeDtypeStruct((num_splits, 1), jnp.float32),
            grid_spec=pltpu.PrefetchScalarGridSpec(
                num_scalar_prefetch=0,
                grid=(num_splits, tps),
                in_specs=[pl.BlockSpec(logits_block, in_map),
                          pl.BlockSpec(targets_block, in_map)],
                out_specs=pl.BlockSpec((1, 1), lambda ci, ti: (ci, 0),
                                       memory_space=pltpu.SMEM),
                scratch_shapes=[acc_scratch]),
            compiler_params=pltpu.CompilerParams(
                dimension_semantics=("parallel", "arbitrary"),
                vmem_limit_bytes=vmem_limit),
        )(logits_in, targets_in)
        total = jnp.sum(partials)
        if reduction == "mean":
            return total / jnp.float32(n)
        return total

    # reduction == 'none': per-sample losses, independent tiles -> fully parallel grid.
    kernel = functools.partial(_none_kernel, gamma=gamma, alpha=alpha,
                               class_axis=class_axis)
    out = pl.pallas_call(
        kernel,
        out_shape=jax.ShapeDtypeStruct(per_sample_shape, jnp.float32),
        grid_spec=pltpu.PrefetchScalarGridSpec(
            num_scalar_prefetch=0,
            grid=(tiles_total,),
            in_specs=[pl.BlockSpec(logits_block, lambda i: block_index(i)),
                      pl.BlockSpec(targets_block, lambda i: block_index(i))],
            out_specs=pl.BlockSpec(per_sample_block, lambda i: block_index(i))),
        compiler_params=pltpu.CompilerParams(
            dimension_semantics=("parallel",),
            vmem_limit_bytes=vmem_limit),
    )(logits_in, targets_in)
    return out[0] if lane_major else out[:, 0]


# ------------------------------ reference ------------------------------------

def _focal_ref(logits, targets, gamma=2.0, alpha=None, reduction="mean"):
    """Pure-JAX reference (same math as the PyTorch module)."""
    logits = logits.astype(jnp.float32)
    logp = jax.nn.log_softmax(logits, axis=-1)
    ce = -jnp.take_along_axis(logp, targets[:, None].astype(jnp.int32), axis=-1)[:, 0]
    pt = jnp.exp(-ce)
    focal = (1.0 - pt) ** gamma * ce
    if alpha is not None:
        focal = alpha * focal
    if reduction == "mean":
        return jnp.mean(focal)
    if reduction == "sum":
        return jnp.sum(focal)
    return focal


if __name__ == "__main__":
    key = jax.random.PRNGKey(0)
    k1, k2, k3, k4, k5, k6 = jax.random.split(key, 6)

    # Small-C case (lane-major path), matching the module's [N, C] logits / [N] targets.
    N, C = 8, 4
    logits = jax.random.normal(k1, (N, C), dtype=jnp.float32)
    targets = jax.random.randint(k2, (N,), 0, C, dtype=jnp.int32)

    loss_mean = focal_loss(logits, targets, gamma=2.0, alpha=None, reduction="mean")
    jax.block_until_ready(loss_mean)
    assert jnp.allclose(loss_mean, _focal_ref(logits, targets, 2.0, None, "mean"),
                        atol=1e-5, rtol=1e-5)

    loss_sum = focal_loss(logits, targets, gamma=2.0, alpha=None, reduction="sum")
    assert jnp.allclose(loss_sum, _focal_ref(logits, targets, 2.0, None, "sum"),
                        atol=1e-5, rtol=1e-5)

    loss_none = focal_loss(logits, targets, gamma=2.0, alpha=None, reduction="none")
    assert jnp.allclose(loss_none, _focal_ref(logits, targets, 2.0, None, "none"),
                        atol=1e-5, rtol=1e-5)

    # Multi-tile lane-major path (bf16 input): uneven 2-way split + padded last tile.
    N2, C2 = 300, 16
    logits2 = jax.random.normal(k3, (N2, C2), dtype=jnp.bfloat16)
    targets2 = jax.random.randint(k4, (N2,), 0, C2, dtype=jnp.int32)
    loss2 = focal_loss(logits2, targets2, gamma=2.0, alpha=0.25,
                       reduction="mean", tile=128)
    jax.block_until_ready(loss2)
    assert jnp.allclose(loss2, _focal_ref(logits2, targets2, 2.0, 0.25, "mean"),
                        atol=2e-3, rtol=2e-3)

    loss2_none = focal_loss(logits2, targets2, gamma=2.0, alpha=0.25,
                            reduction="none", tile=128)
    assert jnp.allclose(loss2_none, _focal_ref(logits2, targets2, 2.0, 0.25, "none"),
                        atol=2e-3, rtol=2e-3)

    # Large-C (row-major fallback) path: multi-tile + padded last tile + 2-way split.
    N3, C3 = 20, 192
    logits3 = jax.random.normal(k5, (N3, C3), dtype=jnp.float32)
    targets3 = jax.random.randint(k6, (N3,), 0, C3, dtype=jnp.int32)
    loss3 = focal_loss(logits3, targets3, gamma=2.0, reduction="mean", tile=8)
    jax.block_until_ready(loss3)
    assert jnp.allclose(loss3, _focal_ref(logits3, targets3, 2.0, None, "mean"),
                        atol=1e-5, rtol=1e-5)

    print("KERNEL_OK")
</pallas_src>

<mosaic_0001>
module attributes {stable_mosaic.version = 11 : i64} {
  func.func @_reduce_kernel(%arg0: i32, %arg1: i32, %arg2: memref<4x8xf32, #tpu.memory_space<vmem>>, %arg3: memref<1x8xi32, #tpu.memory_space<vmem>>, %arg4: memref<1x1xf32, #tpu.memory_space<smem>>, %arg5: memref<1x8xf32, #tpu.memory_space<vmem>>) attributes {dimension_semantics = [#tpu.dimension_semantics<parallel>, #tpu.dimension_semantics<arbitrary>], iteration_bounds = array<i64: 1, 1>, scalar_prefetch = 0 : i64, scratch_operands = 1 : i64, tpu.core_type = #tpu.core_type<tc>, window_params = [{transform_indices = @transform_0, window_bounds = array<i64: 4, 8>}, {transform_indices = @transform_1, window_bounds = array<i64: 1, 8>}, {transform_indices = @transform_2, window_bounds = array<i64: 1, 1>}]} {
    %c0_i32 = arith.constant 0 : i32
    %0 = arith.cmpi eq, %arg1, %c0_i32 : i32
    %1 = arith.extui %0 : i1 to i32
    %c0_i32_0 = arith.constant 0 : i32
    %2 = arith.cmpi ne, %1, %c0_i32_0 : i32
    scf.if %2 {
      %cst_17 = arith.constant 0.000000e+00 : f32
      %44 = vector.broadcast %cst_17 : f32 to vector<1x8xf32>
      %c0_18 = arith.constant 0 : index
      %c0_19 = arith.constant 0 : index
      %45 = vector.load %arg5[%c0_18, %c0_19] : memref<1x8xf32, #tpu.memory_space<vmem>>, vector<1x8xf32>
      tpu.vector_store %arg5[%c0_18, %c0_19], %44 {strides = array<i32>} : memref<1x8xf32, #tpu.memory_space<vmem>>, vector<1x8xf32>,
    } else {
    }
    %c0 = arith.constant 0 : index
    %c0_1 = arith.constant 0 : index
    %3 = vector.load %arg2[%c0, %c0_1] : memref<4x8xf32, #tpu.memory_space<vmem>>, vector<4x8xf32>
    %c0_2 = arith.constant 0 : index
    %c0_3 = arith.constant 0 : index
    %4 = vector.load %arg3[%c0_2, %c0_3] : memref<1x8xi32, #tpu.memory_space<vmem>>, vector<1x8xi32>
    %cst = arith.constant dense<0xFF800000> : vector<8xf32>
    %5 = vector.multi_reduction <maximumf>, %3, %cst [0] : vector<4x8xf32> to vector<8xf32>
    %6 = vector.shape_cast %5 : vector<8xf32> to vector<1x8xf32>
    %7 = vector.broadcast %6 : vector<1x8xf32> to vector<4x8xf32>
    %8 = arith.subf %3, %7 : vector<4x8xf32>
    %9 = math.exp %8 : vector<4x8xf32>
    %cst_4 = arith.constant dense<0.000000e+00> : vector<8xf32>
    %10 = vector.multi_reduction <add>, %9, %cst_4 [0] : vector<4x8xf32> to vector<8xf32>
    %11 = vector.shape_cast %10 : vector<8xf32> to vector<1x8xf32>
    %12 = math.log %11 : vector<1x8xf32>
    %13 = tpu.iota {dimensions = array<i32: 0>} : vector<4x8xi32>
    %14 = vector.broadcast %4 : vector<1x8xi32> to vector<4x8xi32>
    %15 = arith.cmpi eq, %13, %14 : vector<4x8xi32>
    %cst_5 = arith.constant 0.000000e+00 : f32
    %16 = vector.broadcast %cst_5 : f32 to vector<4x8xf32>
    %17 = arith.select %15, %8, %16 : vector<4x8xi1>, vector<4x8xf32>
    %cst_6 = arith.constant dense<0.000000e+00> : vector<8xf32>
    %18 = vector.multi_reduction <add>, %17, %cst_6 [0] : vector<4x8xf32> to vector<8xf32>
    %19 = vector.shape_cast %18 : vector<8xf32> to vector<1x8xf32>
    %20 = arith.subf %19, %12 : vector<1x8xf32>
    %cst_7 = arith.constant 0.000000e+00 : f32
    %21 = vector.broadcast %cst_7 : f32 to vector<1x8xf32>
    %22 = arith.subf %21, %20 : vector<1x8xf32>
    %23 = math.exp %20 : vector<1x8xf32>
    %cst_8 = arith.constant 1.000000e+00 : f32
    %24 = vector.broadcast %cst_8 : f32 to vector<1x8xf32>
    %25 = arith.subf %24, %23 : vector<1x8xf32>
    %26 = arith.mulf %25, %25 : vector<1x8xf32>
    %27 = arith.mulf %26, %22 : vector<1x8xf32>
    %c1_i32 = arith.constant 1 : i32
    %28 = arith.muli %arg0, %c1_i32 : i32
    %29 = arith.addi %28, %arg1 : i32
    %c8_i32 = arith.constant 8 : i32
    %30 = arith.muli %29, %c8_i32 : i32
    %31 = tpu.iota {dimensions = array<i32: 1>} : vector<1x8xi32>
    %32 = vector.broadcast %30 : i32 to vector<1x8xi32>
    %33 = arith.addi %31, %32 : vector<1x8xi32>
    %c0_9 = arith.constant 0 : index
    %c0_10 = arith.constant 0 : index
    %34 = vector.load %arg5[%c0_9, %c0_10] : memref<1x8xf32, #tpu.memory_space<vmem>>, vector<1x8xf32>
    %c8_i32_11 = arith.constant 8 : i32
    %35 = vector.broadcast %c8_i32_11 : i32 to vector<1x8xi32>
    %36 = arith.cmpi slt, %33, %35 : vector<1x8xi32>
    %cst_12 = arith.constant 0.000000e+00 : f32
    %37 = vector.broadcast %cst_12 : f32 to vector<1x8xf32>
    %38 = arith.select %36, %27, %37 : vector<1x8xi1>, vector<1x8xf32>
    %39 = arith.addf %34, %38 : vector<1x8xf32>
    %c0_13 = arith.constant 0 : index
    %c0_14 = arith.constant 0 : index
    %40 = vector.load %arg5[%c0_13, %c0_14] : memref<1x8xf32, #tpu.memory_space<vmem>>, vector<1x8xf32>
    tpu.vector_store %arg5[%c0_13, %c0_14], %39 {strides = array<i32>} : memref<1x8xf32, #tpu.memory_space<vmem>>, vector<1x8xf32>,
    %c0_i32_15 = arith.constant 0 : i32
    %41 = arith.cmpi eq, %arg1, %c0_i32_15 : i32
    %42 = arith.extui %41 : i1 to i32
    %c0_i32_16 = arith.constant 0 : i32
    %43 = arith.cmpi ne, %42, %c0_i32_16 : i32
    scf.if %43 {
      %c0_17 = arith.constant 0 : index
      %c0_18 = arith.constant 0 : index
      %44 = vector.load %arg5[%c0_17, %c0_18] : memref<1x8xf32, #tpu.memory_space<vmem>>, vector<1x8xf32>
      %45 = vector.shape_cast %44 : vector<1x8xf32> to vector<1x1x8xf32>
      %cst_19 = arith.constant dense<0.000000e+00> : vector<1xf32>
      %46 = vector.multi_reduction <add>, %45, %cst_19 [1, 2] : vector<1x1x8xf32> to vector<1xf32>
      %47 = vector.shape_cast %46 : vector<1xf32> to vector<1x1x1xf32>
      %48 = vector.extract %47[0, 0, 0] : f32 from vector<1x1x1xf32>
      %c0_20 = arith.constant 0 : index
      %c0_21 = arith.constant 0 : index
      %49 = memref.load %arg4[%c0_20, %c0_21] : memref<1x1xf32, #tpu.memory_space<smem>>
      memref.store %48, %arg4[%c0_20, %c0_21] : memref<1x1xf32, #tpu.memory_space<smem>>
    } else {
    }
    return
  }
  func.func @transform_0(%arg0: i32, %arg1: i32) -> (i32, i32) {
    %c1_i32 = arith.constant 1 : i32
    %0 = arith.muli %arg0, %c1_i32 : i32
    %1 = arith.addi %0, %arg1 : i32
    %c0_i32 = arith.constant 0 : i32
    %2 = arith.minsi %1, %c0_i32 : i32
    %c0_i32_0 = arith.constant 0 : i32
    %c0_i32_1 = arith.constant 0 : i32
    return %c0_i32_0, %2 : i32, i32
  }
  func.func @transform_1(%arg0: i32, %arg1: i32) -> (i32, i32) {
    %c1_i32 = arith.constant 1 : i32
    %0 = arith.muli %arg0, %c1_i32 : i32
    %1 = arith.addi %0, %arg1 : i32
    %c0_i32 = arith.constant 0 : i32
    %2 = arith.minsi %1, %c0_i32 : i32
    %c0_i32_0 = arith.constant 0 : i32
    %c0_i32_1 = arith.constant 0 : i32
    return %c0_i32_0, %2 : i32, i32
  }
  func.func @transform_2(%arg0: i32, %arg1: i32) -> (i32, i32) {
    %c0_i32 = arith.constant 0 : i32
    %c0_i32_0 = arith.constant 0 : i32
    return %arg0, %c0_i32 : i32, i32
  }
}

</mosaic_0001>

<llo_original>
// kernel: tpu_custom_call.1
$region0: #{tpu_custom_call.1}
  #allocation0 [shape = 'u32[]', space=smem, size = 0x4, offset = 0x4, fixed_abs, tag = 'smem constant byte address 0x4 - core index']
  #allocation1 [shape = 'u32[144,128]{1,0:T(1,128)}', space=vmem, size = 0x12000, scoped, tag = 'internal scratch']
  #allocation2 [shape = 'f32[1,8]{1,0:T(1,128)}', space=vmem, size = 0x200, scoped, tag = 'scratch operand']
  %s0 = inlined_call_operand.hbm [shape: f32[4,8], index: 0, kind: input, shape index: {}]
  %s1 = inlined_call_operand.vmem [shape: s32[1,8], index: 1, kind: input, shape index: {}]
  %s2 = inlined_call_operand.hbm [shape: f32[1,1], index: 2, kind: output, shape index: {}]
  %s3 = sld [smem:[#allocation0]]
  $region30: #{tpu_custom_call.1} parent=0
    _
  %s5 = ssub.s32 1, %s3
  %s6 = scalar_select 0, %s5, %s3
  $region1: #{tpu_custom_call.1} parent=0
    #allocation3 [shape = 'u8[2048]{0}', space=vmem, size = 0x800, scoped, tag = 'input window, operand 0, single buffered']
    #allocation4 [shape = 's32[1]{0}', space=sflag, size = 0x4, scoped, tag = 'scoped memory for tpu_custom_call.1']
    #allocation5 [shape = 's32[1]{0}', space=sflag, size = 0x4, scoped, tag = 'scoped memory for tpu_custom_call.1']
    #allocation6 [shape = 'u8[512]{0}', space=smem, size = 0x200, scoped, tag = 'output window, operand 0, single buffered']
    %7 = vsyncpa [#allocation4], 0
    %8 = vsyncpa [#allocation5], 0
    // Predicated region
    $region2: #{tpu_custom_call.1} parent=1 // pred_check
      _
    $region3: #{tpu_custom_call.1} parent=1 // pred_check_branch
      %10 = sbr.rel (0) target = $region5
    $region4: #{tpu_custom_call.1} parent=1 // pred_region
      %s11 = sadd.s32 0, 0
      %p12 = scmp.lt.s32.totalorder %s11, 0
      %s13 = scalar_select %p12, %s11, 0
      %s15 = ssub.s32 64, 64
      %16 = vsyncadd [#allocation4], %s15
      %s17 = smul.addr %s13, 64
      %s18 = scalar_lea.hbm %s0, %s17
      %s20 = sshll.u32 [#allocation3], 4
      %s21 = int_to_ptr.vmem [resolvable:$true] %s20
      %23 = dma.hbm_to_vmem [thread:$0]  %s18, 64, %s21, [#allocation4]
    $region5: #{tpu_custom_call.1} parent=1 // pred_fallthru
      _
    // Predicated region
    $region6: #{tpu_custom_call.1} parent=1 // pred_check
      _
    $region7: #{tpu_custom_call.1} parent=1 // pred_check_branch
      %25 = sbr.rel (0) target = $region9
    $region8: #{tpu_custom_call.1} parent=1 // pred_region
      %s26 = sadd.s32 0, 0
      %p27 = scmp.lt.s32.totalorder %s26, 0
      %s28 = scalar_select %p27, %s26, 0
      %p29 = scmp.lt.s32.totalorder %s28, 0
      %s30 = scalar_select %p29, %s28, 0
      %s31 = scalar_lea.vmem %s1, %s30
      %s32 = sadd.s32 0, 0
      %p33 = scmp.lt.s32.totalorder %s32, 0
      %s34 = scalar_select %p33, %s32, 0
    $region9: #{tpu_custom_call.1} parent=1 // pred_fallthru
      _
    // Predicated region
    $region10: #{tpu_custom_call.1} parent=1 // pred_check
      _
    $region11: #{tpu_custom_call.1} parent=1 // pred_check_branch
      %36 = sbr.rel (0) target = $region13
    $region12: #{tpu_custom_call.1} parent=1 // pred_region
      %37 = dma.done [#allocation4], 64
    $region13: #{tpu_custom_call.1} parent=1 // pred_fallthru
      _
    %s38 = sadd.s32 0, 0
    %p39 = scmp.lt.s32.totalorder %s38, 0
    %s40 = scalar_select %p39, %s38, 0
    %p41 = scmp.lt.s32.totalorder %s40, 0
    %s42 = scalar_select %p41, %s40, 0
    %s43 = scalar_lea.vmem %s1, %s42
    %s44 = sadd.s32 0, 0
    %p45 = scmp.lt.s32.totalorder %s44, 0
    %s46 = scalar_select %p45, %s44, 0
    %s47 = sadd.s32 0, 0
    %p48 = scmp.lt.s32.totalorder %s47, 0
    %s49 = scalar_select %p48, %s47, 0
    %p50 = scmp.lt.s32.totalorder %s49, 0
    %s51 = scalar_select %p50, %s49, 0
    %s52 = scalar_lea.vmem %s1, %s51
    %s53 = sadd.s32 0, 0
    %p54 = scmp.lt.s32.totalorder %s53, 0
    %s55 = scalar_select %p54, %s53, 0
    %p56 = scmp.eq.s32.totalorder 0, 0
    // Predicated region
    $region14: #{tpu_custom_call.1} parent=1 // pred_check
      %p57 = pneg %p56
    $region15: #{tpu_custom_call.1} parent=1 // pred_check_branch
      %59 = sbr.rel (%p57) target = $region17
    $region16: #{tpu_custom_call.1} parent=1 // pred_region
      %vm60 = vcmask 57344
      %61 = vst.msk [vmem:[#allocation2] sm:$0x1] %vm60, 0.0
    $region17: #{tpu_custom_call.1} parent=1 // pred_fallthru
      _
    %v62 = vld [vmem:[#allocation3] sm:$0xf]
    %v63 = vld [vmem:[%s52] sm:$0x1]
    %vm64 = vcmask 60416
    %v65 = vsel %vm64, %v62, -inf
    %v66 = vrot.slane %v65, 4
    %v67 = vmax.f32 %v65, %v66
    %v68 = vrot.slane %v67, 2
    %v69 = vmax.f32 %v67, %v68
    %v70 = vrot.slane %v69, 1
    %v71 = vmax.f32 %v69, %v70
    %v72 = vsub.f32 %v62, %v71
    %v73 = vmul.f32 %v72, 1.442695
    %v74 = vpow.pop %v73
    %v75 = vsel %vm64, %v74, 0.0
    %v76 = vrot.slane %v75, 4
    %v77 = vadd.f32 %v75, %v76
    %v78 = vrot.slane %v77, 2
    %v79 = vadd.f32 %v77, %v78
    %v80 = vrot.slane %v79, 1
    %v81 = vadd.f32 %v79, %v80
    %v82 = vlog2.pop %v81
    %v83 = vmul.f32 %v82, 0.6931472
    %v84 = vlaneseq
    %v85 = vshrl.u32 %v84, 7
    %v86 = vlaneseq
    %v87 = vshrl.u32 %v86, 7
    %v88 = vsub.s32 0, %v87
    %v89 = vrot.slane %v63, %v88
    %vm90 = vcmp.eq.s32.totalorder %v85, %v89
    %v91 = vsel %vm90, %v72, 0.0
    %v92 = vsel %vm64, %v91, 0.0
    %v93 = vrot.slane %v92, 4
    %v94 = vadd.f32 %v92, %v93
    %v95 = vrot.slane %v94, 2
    %v96 = vadd.f32 %v94, %v95
    %v97 = vrot.slane %v96, 1
    %v98 = vadd.f32 %v96, %v97
    %v99 = vsub.f32 %v98, %v83
    %v100 = vsub.f32 0.0, %v99
    %v101 = vmul.f32 %v99, 1.442695
    %v102 = vpow.pop %v101
    %v103 = vsub.f32 1.0, %v102
    %v104 = vmul.f32 %v103, %v103
    %v105 = vmul.f32 %v104, %v100
    %s106 = sadd.s32 0, 0
    %s107 = smul.u32 %s106, 8
    %v108 = vlaneseq
    %v109 = vand.u32 %v108, 127
    %v110 = vstv %s107
    %v111 = vadd.s32 %v109, %v110
    %v112 = vld [vmem:[#allocation2] sm:$0x1]
    %vm113 = vcmp.lt.s32.totalorder %v111, 8
    %v114 = vsel %vm113, %v105, 0.0
    %v115 = vadd.f32 %v112, %v114
    %vm116 = vcmask 57344
    %117 = vst.msk [vmem:[#allocation2] sm:$0x1] %vm116, %v115
    // Predicated region
    $region18: #{tpu_custom_call.1} parent=1 // pred_check
      %p118 = pneg %p56
    $region19: #{tpu_custom_call.1} parent=1 // pred_check_branch
      %120 = sbr.rel (%p118) target = $region21
    $region20: #{tpu_custom_call.1} parent=1 // pred_region
      %v121 = vld [vmem:[#allocation2] sm:$0x1]
      %v122 = vsel %vm116, %v121, 0.0
      %123 = vadd.xlane.f32.xlu0 %v122
      %v124 = vpop.xlane.xlu0 %123
      %v125 = vrot.slane %v124, 4
      %v126 = vadd.f32 %v124, %v125
      %v127 = vrot.slane %v126, 2
      %v128 = vadd.f32 %v126, %v127
      %v129 = vrot.slane %v128, 1
      %v130 = vadd.f32 %v128, %v129
      %s131 = vtos %v130
      %s132 = scalar_lea.smem [#allocation6], 0
      %133 = sst [smem:[%s132]] %s131
    $region21: #{tpu_custom_call.1} parent=1 // pred_fallthru
      _
    // Predicated region
    $region22: #{tpu_custom_call.1} parent=1 // pred_check
      _
    $region23: #{tpu_custom_call.1} parent=1 // pred_check_branch
      %135 = sbr.rel (0) target = $region25
    $region24: #{tpu_custom_call.1} parent=1 // pred_region
      %s137 = ssub.s32 16, 16
      %138 = vsyncadd [#allocation5], %s137
      %141 = dma.smem_to_hbm [#allocation6], 16, %s2, [#allocation5]
    $region25: #{tpu_custom_call.1} parent=1 // pred_fallthru
      _
    // Predicated region
    $region26: #{tpu_custom_call.1} parent=1 // pred_check
      _
    $region27: #{tpu_custom_call.1} parent=1 // pred_check_branch
      %143 = sbr.rel (0) target = $region29
    $region28: #{tpu_custom_call.1} parent=1 // pred_region
      %144 = dma.done [#allocation5], 16
    $region29: #{tpu_custom_call.1} parent=1 // pred_fallthru
      _
    %145 = sfence
    %146 = vsyncpa [#allocation4], 1
    %147 = vsyncpa [#allocation5], 1

</llo_original>
